<compile_context>
chip_gen: v5e
topology: v5e:2x2
jax: 0.10.0
libtpu: 0.0.40
codegen_flags: <defaults>
</compile_context>

<pallas_src>
import functools

import jax
import jax.numpy as jnp
from jax.experimental import pallas as pl
from jax.experimental.pallas import tpu as pltpu

LANES = 128
MAX_BLOCK_BYTES = 1 << 20   # ~1 MiB per input block per pipeline buffer


def _num_tensorcores():
    # Only v7x has 2 TensorCores per chip worth sharding the row range over;
    # v5e/v6e are single-TC, where a 2-way leading axis is pure overhead.
    try:
        kind = jax.devices()[0].device_kind.lower()
    except Exception:
        return 1
    return 2 if "v7" in kind else 1


def _focal_loss_kernel(x_ref, t_ref, sum_ref, cnt_ref, acc_sum, acc_cnt, *,
                       gamma, sub, remaining, nblocks, blocks_per_core):
    c = pl.program_id(0)
    i = pl.program_id(1)

    @pl.when(i == 0)
    def _():
        acc_sum[...] = jnp.zeros_like(acc_sum)
        acc_cnt[...] = jnp.zeros_like(acc_cnt)

    x = x_ref[...].astype(jnp.float32)
    t = t_ref[...].astype(jnp.float32)

    # Shared transcendentals:
    #   softplus(-x)  = max(-x, 0) + log1p(exp(-|x|))
    #   logsigmoid(z) = min(z, 0)  - log1p(exp(-|z|)),  z = -x*(2t-1)
    # For binary {0,1} targets |z| == |x|, so one exp + one log1p serve both.
    # TODO(synk): soft (non-{0,1}) targets would need a separate log1p(exp(-|z|)).
    lp = jnp.log1p(jnp.exp(-jnp.abs(x)))
    base = x - x * t + jnp.maximum(-x, 0.0) + lp
    z = -x * (t * 2.0 - 1.0)
    focal = jnp.exp((jnp.minimum(z, 0.0) - lp) * gamma)
    loss = focal * base
    pos = jnp.where(t > 0.5, 1.0, 0.0)

    blk = c * blocks_per_core + i            # virtual (unclamped) block index

    # Interior blocks: plain reduce-over-chunks + accumulate (no mask work).
    @pl.when(blk < nblocks - 1)
    def _():
        acc_sum[...] += jnp.sum(loss, axis=0)
        acc_cnt[...] += jnp.sum(pos, axis=0)

    # Tail block: mask out lane/row padding and any Pallas-padded region using
    # a block-local flat index (small values — no int32 overflow possible)
    # against the statically known number of valid elements in this block.
    @pl.when(blk == nblocks - 1)
    def _():
        idx = (jax.lax.broadcasted_iota(jnp.int32, loss.shape, 0) * (sub * LANES)
               + jax.lax.broadcasted_iota(jnp.int32, loss.shape, 1) * LANES
               + jax.lax.broadcasted_iota(jnp.int32, loss.shape, 2))
        valid = idx < remaining
        acc_sum[...] += jnp.sum(jnp.where(valid, loss, 0.0), axis=0)
        acc_cnt[...] += jnp.sum(jnp.where(valid, pos, 0.0), axis=0)

    # Virtual blocks with blk >= nblocks (clamped duplicates on the 2-core
    # split) fall through both branches and contribute nothing.

    @pl.when(i == pl.num_programs(1) - 1)
    def _():
        sum_ref[...] = jnp.sum(acc_sum[...], keepdims=True).reshape(1, 1, 1)
        cnt_ref[...] = jnp.sum(acc_cnt[...], keepdims=True).reshape(1, 1, 1)


def only_positive_binary_focal_loss(inp, target, gamma=2.0,
                                    block_bytes=MAX_BLOCK_BYTES):
    if inp.shape != target.shape:
        raise ValueError(
            "Target size ({}) must be the same as input size ({})".format(
                target.shape, inp.shape))

    n = 1
    for d in inp.shape:
        n *= d

    # Dtype-aware sublane packing: 8 rows for 4-byte, 16 for 2-byte, 32 for 1-byte.
    itemsize = jnp.dtype(inp.dtype).itemsize
    sub = max(8, 32 // max(itemsize, 1))
    chunk_elems = sub * LANES

    x = inp.reshape(-1)
    t = target.reshape(-1)
    pad = (-n) % chunk_elems
    if pad:
        x = jnp.pad(x, (0, pad))
        t = jnp.pad(t, (0, pad))
    nchunks = (n + pad) // chunk_elems
    x3 = x.reshape(nchunks, sub, LANES)
    t3 = t.reshape(nchunks, sub, LANES)

    # ~1 MiB input blocks; 2 inputs x 2 pipeline buffers stays well under the
    # default scoped-VMEM limit on every generation (incl. v7x's 64 MiB/TC).
    max_chunks = max(1, block_bytes // (chunk_elems * itemsize))
    tile_chunks = min(max_chunks, nchunks)
    nblocks = -(-nchunks // tile_chunks)

    ncores = _num_tensorcores() if nblocks > 1 else 1
    blocks_per_core = -(-nblocks // ncores)

    # Valid elements in the tail block (static Python int, block-local scale).
    remaining = n - (nblocks - 1) * tile_chunks * chunk_elems

    def in_map(c, i):
        # Clamp virtual block indices past the array; their contribution is
        # skipped in-kernel.
        return (jnp.minimum(c * blocks_per_core + i, nblocks - 1), 0, 0)

    blk_spec = pl.BlockSpec((tile_chunks, sub, LANES), in_map)
    out_spec = pl.BlockSpec((1, 1, 1), lambda c, i: (c, 0, 0))

    kernel = functools.partial(
        _focal_loss_kernel, gamma=float(gamma), sub=sub, remaining=remaining,
        nblocks=nblocks, blocks_per_core=blocks_per_core)

    sums, cnts = pl.pallas_call(
        kernel,
        out_shape=(jax.ShapeDtypeStruct((ncores, 1, 1), jnp.float32),
                   jax.ShapeDtypeStruct((ncores, 1, 1), jnp.float32)),
        grid_spec=pltpu.PrefetchScalarGridSpec(
            num_scalar_prefetch=0,
            grid=(ncores, blocks_per_core),
            in_specs=[blk_spec, blk_spec],
            out_specs=[out_spec, out_spec],
            scratch_shapes=[
                pltpu.VMEM((sub, LANES), jnp.float32),   # loss accumulator
                pltpu.VMEM((sub, LANES), jnp.float32),   # positive-count acc
            ],
        ),
        compiler_params=pltpu.CompilerParams(
            dimension_semantics=("parallel", "arbitrary")),
    )(x3, t3)

    # Tiny final combine/divide on the (ncores,1,1) partials.
    return jnp.sum(sums) / (jnp.sum(cnts) + 1.0)


def _reference(inp, target, gamma=2.0):
    x = inp.astype(jnp.float32)
    t = target.astype(jnp.float32)
    max_val = jnp.maximum(-x, 0.0)
    loss = x - x * t + max_val + jnp.log(jnp.exp(-max_val) + jnp.exp(-x - max_val))
    invprobs = jax.nn.log_sigmoid(-x * (t * 2.0 - 1.0))
    loss = jnp.exp(invprobs * gamma) * loss
    return jnp.sum(loss) / (jnp.sum((t > 0.5).astype(jnp.float32)) + 1.0)


if __name__ == "__main__":
    key = jax.random.PRNGKey(0)
    k1, k2, k3, k4 = jax.random.split(key, 4)

    # Primary check: NCHW input as in the module, single block.
    B, C, H, W = 2, 4, 16, 16
    x = jax.random.normal(k1, (B, C, H, W), dtype=jnp.float32)
    target = (jax.random.uniform(k2, (B, C, H, W)) > 0.7).astype(jnp.float32)

    loss = only_positive_binary_focal_loss(x, target, gamma=2.0)
    loss = jax.block_until_ready(loss)
    ref = _reference(x, target, gamma=2.0)
    assert jnp.allclose(loss, ref, rtol=1e-5, atol=1e-5), (loss, ref)

    # Irregular size (exercises on-chip tail masking) + forced multi-block
    # (exercises interior/tail split) via a tiny block-size override.
    x2 = jax.random.normal(k3, (3, 5, 7, 11), dtype=jnp.float32)
    t2 = (jax.random.uniform(k4, (3, 5, 7, 11)) > 0.6).astype(jnp.float32)
    loss2 = only_positive_binary_focal_loss(x2, t2, gamma=2.0, block_bytes=4096)
    loss2 = jax.block_until_ready(loss2)
    ref2 = _reference(x2, t2, gamma=2.0)
    assert jnp.allclose(loss2, ref2, rtol=1e-5, atol=1e-5), (loss2, ref2)

    print("KERNEL_OK")
</pallas_src>

<mosaic_0001>
module attributes {stable_mosaic.version = 11 : i64} {
  func.func @_focal_loss_kernel(%arg0: i32, %arg1: i32, %arg2: memref<2x8x128xf32, #tpu.memory_space<vmem>>, %arg3: memref<2x8x128xf32, #tpu.memory_space<vmem>>, %arg4: memref<1x1x1xf32, #tpu.memory_space<vmem>>, %arg5: memref<1x1x1xf32, #tpu.memory_space<vmem>>, %arg6: memref<8x128xf32, #tpu.memory_space<vmem>>, %arg7: memref<8x128xf32, #tpu.memory_space<vmem>>) attributes {dimension_semantics = [#tpu.dimension_semantics<parallel>, #tpu.dimension_semantics<arbitrary>], iteration_bounds = array<i64: 1, 1>, scalar_prefetch = 0 : i64, scratch_operands = 2 : i64, tpu.core_type = #tpu.core_type<tc>, window_params = [{transform_indices = @transform_0, window_bounds = array<i64: 2, 8, 128>}, {transform_indices = @transform_1, window_bounds = array<i64: 2, 8, 128>}, {transform_indices = @transform_2, window_bounds = array<i64: 1, 1, 1>}, {transform_indices = @transform_3, window_bounds = array<i64: 1, 1, 1>}]} {
    %c0_i32 = arith.constant 0 : i32
    %0 = arith.cmpi eq, %arg1, %c0_i32 : i32
    %1 = arith.extui %0 : i1 to i32
    %c0_i32_0 = arith.constant 0 : i32
    %2 = arith.cmpi ne, %1, %c0_i32_0 : i32
    scf.if %2 {
      %cst_22 = arith.constant 0.000000e+00 : f32
      %48 = vector.broadcast %cst_22 : f32 to vector<8x128xf32>
      %c0_23 = arith.constant 0 : index
      %c0_24 = arith.constant 0 : index
      %49 = vector.load %arg6[%c0_23, %c0_24] : memref<8x128xf32, #tpu.memory_space<vmem>>, vector<8x128xf32>
      tpu.vector_store %arg6[%c0_23, %c0_24], %48 {strides = array<i32>} : memref<8x128xf32, #tpu.memory_space<vmem>>, vector<8x128xf32>,
      %cst_25 = arith.constant 0.000000e+00 : f32
      %50 = vector.broadcast %cst_25 : f32 to vector<8x128xf32>
      %c0_26 = arith.constant 0 : index
      %c0_27 = arith.constant 0 : index
      %51 = vector.load %arg7[%c0_26, %c0_27] : memref<8x128xf32, #tpu.memory_space<vmem>>, vector<8x128xf32>
      tpu.vector_store %arg7[%c0_26, %c0_27], %50 {strides = array<i32>} : memref<8x128xf32, #tpu.memory_space<vmem>>, vector<8x128xf32>,
    } else {
    }
    %c0 = arith.constant 0 : index
    %c0_1 = arith.constant 0 : index
    %c0_2 = arith.constant 0 : index
    %3 = vector.load %arg2[%c0, %c0_1, %c0_2] : memref<2x8x128xf32, #tpu.memory_space<vmem>>, vector<2x8x128xf32>
    %c0_3 = arith.constant 0 : index
    %c0_4 = arith.constant 0 : index
    %c0_5 = arith.constant 0 : index
    %4 = vector.load %arg3[%c0_3, %c0_4, %c0_5] : memref<2x8x128xf32, #tpu.memory_space<vmem>>, vector<2x8x128xf32>
    %5 = math.absf %3 : vector<2x8x128xf32>
    %cst = arith.constant 0.000000e+00 : f32
    %6 = vector.broadcast %cst : f32 to vector<2x8x128xf32>
    %7 = arith.subf %6, %5 : vector<2x8x128xf32>
    %8 = math.exp %7 : vector<2x8x128xf32>
    %9 = math.log1p %8 : vector<2x8x128xf32>
    %10 = arith.mulf %3, %4 : vector<2x8x128xf32>
    %11 = arith.subf %3, %10 : vector<2x8x128xf32>
    %cst_6 = arith.constant 0.000000e+00 : f32
    %12 = vector.broadcast %cst_6 : f32 to vector<2x8x128xf32>
    %13 = arith.subf %12, %3 : vector<2x8x128xf32>
    %cst_7 = arith.constant 0.000000e+00 : f32
    %14 = vector.broadcast %cst_7 : f32 to vector<2x8x128xf32>
    %15 = arith.maximumf %13, %14 : vector<2x8x128xf32>
    %16 = arith.addf %11, %15 : vector<2x8x128xf32>
    %17 = arith.addf %16, %9 : vector<2x8x128xf32>
    %cst_8 = arith.constant 0.000000e+00 : f32
    %18 = vector.broadcast %cst_8 : f32 to vector<2x8x128xf32>
    %19 = arith.subf %18, %3 : vector<2x8x128xf32>
    %cst_9 = arith.constant 2.000000e+00 : f32
    %20 = vector.broadcast %cst_9 : f32 to vector<2x8x128xf32>
    %21 = arith.mulf %4, %20 : vector<2x8x128xf32>
    %cst_10 = arith.constant 1.000000e+00 : f32
    %22 = vector.broadcast %cst_10 : f32 to vector<2x8x128xf32>
    %23 = arith.subf %21, %22 : vector<2x8x128xf32>
    %24 = arith.mulf %19, %23 : vector<2x8x128xf32>
    %cst_11 = arith.constant 0.000000e+00 : f32
    %25 = vector.broadcast %cst_11 : f32 to vector<2x8x128xf32>
    %26 = arith.minimumf %24, %25 : vector<2x8x128xf32>
    %27 = arith.subf %26, %9 : vector<2x8x128xf32>
    %cst_12 = arith.constant 2.000000e+00 : f32
    %28 = vector.broadcast %cst_12 : f32 to vector<2x8x128xf32>
    %29 = arith.mulf %27, %28 : vector<2x8x128xf32>
    %30 = math.exp %29 : vector<2x8x128xf32>
    %31 = arith.mulf %30, %17 : vector<2x8x128xf32>
    %cst_13 = arith.constant 5.000000e-01 : f32
    %32 = vector.broadcast %cst_13 : f32 to vector<2x8x128xf32>
    %33 = arith.cmpf ogt, %4, %32 : vector<2x8x128xf32>
    %cst_14 = arith.constant 1.000000e+00 : f32
    %cst_15 = arith.constant 0.000000e+00 : f32
    %34 = vector.broadcast %cst_14 : f32 to vector<2x8x128xf32>
    %35 = vector.broadcast %cst_15 : f32 to vector<2x8x128xf32>
    %36 = arith.select %33, %34, %35 : vector<2x8x128xi1>, vector<2x8x128xf32>
    %c1_i32 = arith.constant 1 : i32
    %37 = arith.muli %arg0, %c1_i32 : i32
    %38 = arith.addi %37, %arg1 : i32
    %c0_i32_16 = arith.constant 0 : i32
    %39 = arith.cmpi slt, %38, %c0_i32_16 : i32
    %40 = arith.extui %39 : i1 to i32
    %c0_i32_17 = arith.constant 0 : i32
    %41 = arith.cmpi ne, %40, %c0_i32_17 : i32
    scf.if %41 {
      %c0_22 = arith.constant 0 : index
      %c0_23 = arith.constant 0 : index
      %48 = vector.load %arg6[%c0_22, %c0_23] : memref<8x128xf32, #tpu.memory_space<vmem>>, vector<8x128xf32>
      %cst_24 = arith.constant dense<0.000000e+00> : vector<8x128xf32>
      %49 = vector.multi_reduction <add>, %31, %cst_24 [0] : vector<2x8x128xf32> to vector<8x128xf32>
      %50 = arith.addf %48, %49 : vector<8x128xf32>
      %c0_25 = arith.constant 0 : index
      %c0_26 = arith.constant 0 : index
      %51 = vector.load %arg6[%c0_25, %c0_26] : memref<8x128xf32, #tpu.memory_space<vmem>>, vector<8x128xf32>
      tpu.vector_store %arg6[%c0_25, %c0_26], %50 {strides = array<i32>} : memref<8x128xf32, #tpu.memory_space<vmem>>, vector<8x128xf32>,
      %c0_27 = arith.constant 0 : index
      %c0_28 = arith.constant 0 : index
      %52 = vector.load %arg7[%c0_27, %c0_28] : memref<8x128xf32, #tpu.memory_space<vmem>>, vector<8x128xf32>
      %cst_29 = arith.constant dense<0.000000e+00> : vector<8x128xf32>
      %53 = vector.multi_reduction <add>, %36, %cst_29 [0] : vector<2x8x128xf32> to vector<8x128xf32>
      %54 = arith.addf %52, %53 : vector<8x128xf32>
      %c0_30 = arith.constant 0 : index
      %c0_31 = arith.constant 0 : index
      %55 = vector.load %arg7[%c0_30, %c0_31] : memref<8x128xf32, #tpu.memory_space<vmem>>, vector<8x128xf32>
      tpu.vector_store %arg7[%c0_30, %c0_31], %54 {strides = array<i32>} : memref<8x128xf32, #tpu.memory_space<vmem>>, vector<8x128xf32>,
    } else {
    }
    %c0_i32_18 = arith.constant 0 : i32
    %42 = arith.cmpi eq, %38, %c0_i32_18 : i32
    %43 = arith.extui %42 : i1 to i32
    %c0_i32_19 = arith.constant 0 : i32
    %44 = arith.cmpi ne, %43, %c0_i32_19 : i32
    scf.if %44 {
      %48 = tpu.iota {dimensions = array<i32: 0>} : vector<2x8x128xi32>
      %c1024_i32 = arith.constant 1024 : i32
      %49 = vector.broadcast %c1024_i32 : i32 to vector<2x8x128xi32>
      %50 = arith.muli %48, %49 : vector<2x8x128xi32>
      %51 = tpu.iota {dimensions = array<i32: 1>} : vector<2x8x128xi32>
      %c128_i32 = arith.constant 128 : i32
      %52 = vector.broadcast %c128_i32 : i32 to vector<2x8x128xi32>
      %53 = arith.muli %51, %52 : vector<2x8x128xi32>
      %54 = arith.addi %50, %53 : vector<2x8x128xi32>
      %55 = tpu.iota {dimensions = array<i32: 2>} : vector<2x8x128xi32>
      %56 = arith.addi %54, %55 : vector<2x8x128xi32>
      %c2048_i32 = arith.constant 2048 : i32
      %57 = vector.broadcast %c2048_i32 : i32 to vector<2x8x128xi32>
      %58 = arith.cmpi slt, %56, %57 : vector<2x8x128xi32>
      %c0_22 = arith.constant 0 : index
      %c0_23 = arith.constant 0 : index
      %59 = vector.load %arg6[%c0_22, %c0_23] : memref<8x128xf32, #tpu.memory_space<vmem>>, vector<8x128xf32>
      %cst_24 = arith.constant 0.000000e+00 : f32
      %60 = vector.broadcast %cst_24 : f32 to vector<2x8x128xf32>
      %61 = arith.select %58, %31, %60 : vector<2x8x128xi1>, vector<2x8x128xf32>
      %cst_25 = arith.constant dense<0.000000e+00> : vector<8x128xf32>
      %62 = vector.multi_reduction <add>, %61, %cst_25 [0] : vector<2x8x128xf32> to vector<8x128xf32>
      %63 = arith.addf %59, %62 : vector<8x128xf32>
      %c0_26 = arith.constant 0 : index
      %c0_27 = arith.constant 0 : index
      %64 = vector.load %arg6[%c0_26, %c0_27] : memref<8x128xf32, #tpu.memory_space<vmem>>, vector<8x128xf32>
      tpu.vector_store %arg6[%c0_26, %c0_27], %63 {strides = array<i32>} : memref<8x128xf32, #tpu.memory_space<vmem>>, vector<8x128xf32>,
      %c0_28 = arith.constant 0 : index
      %c0_29 = arith.constant 0 : index
      %65 = vector.load %arg7[%c0_28, %c0_29] : memref<8x128xf32, #tpu.memory_space<vmem>>, vector<8x128xf32>
      %cst_30 = arith.constant 0.000000e+00 : f32
      %66 = vector.broadcast %cst_30 : f32 to vector<2x8x128xf32>
      %67 = arith.select %58, %36, %66 : vector<2x8x128xi1>, vector<2x8x128xf32>
      %cst_31 = arith.constant dense<0.000000e+00> : vector<8x128xf32>
      %68 = vector.multi_reduction <add>, %67, %cst_31 [0] : vector<2x8x128xf32> to vector<8x128xf32>
      %69 = arith.addf %65, %68 : vector<8x128xf32>
      %c0_32 = arith.constant 0 : index
      %c0_33 = arith.constant 0 : index
      %70 = vector.load %arg7[%c0_32, %c0_33] : memref<8x128xf32, #tpu.memory_space<vmem>>, vector<8x128xf32>
      tpu.vector_store %arg7[%c0_32, %c0_33], %69 {strides = array<i32>} : memref<8x128xf32, #tpu.memory_space<vmem>>, vector<8x128xf32>,
    } else {
    }
    %c0_i32_20 = arith.constant 0 : i32
    %45 = arith.cmpi eq, %arg1, %c0_i32_20 : i32
    %46 = arith.extui %45 : i1 to i32
    %c0_i32_21 = arith.constant 0 : i32
    %47 = arith.cmpi ne, %46, %c0_i32_21 : i32
    scf.if %47 {
      %c0_22 = arith.constant 0 : index
      %c0_23 = arith.constant 0 : index
      %48 = vector.load %arg6[%c0_22, %c0_23] : memref<8x128xf32, #tpu.memory_space<vmem>>, vector<8x128xf32>
      %49 = vector.shape_cast %48 : vector<8x128xf32> to vector<1x8x128xf32>
      %cst_24 = arith.constant dense<0.000000e+00> : vector<1xf32>
      %50 = vector.multi_reduction <add>, %49, %cst_24 [1, 2] : vector<1x8x128xf32> to vector<1xf32>
      %51 = vector.shape_cast %50 : vector<1xf32> to vector<1x1x1xf32>
      %52 = vector.extract %51[0, 0, 0] : f32 from vector<1x1x1xf32>
      %53 = vector.broadcast %52 : f32 to vector<1x1xf32>
      %54 = vector.shape_cast %53 : vector<1x1xf32> to vector<1x1x1xf32>
      %c0_25 = arith.constant 0 : index
      %c0_26 = arith.constant 0 : index
      %c0_27 = arith.constant 0 : index
      %55 = vector.load %arg4[%c0_25, %c0_26, %c0_27] : memref<1x1x1xf32, #tpu.memory_space<vmem>>, vector<1x1x1xf32>
      tpu.vector_store %arg4[%c0_25, %c0_26, %c0_27], %54 {strides = array<i32>} : memref<1x1x1xf32, #tpu.memory_space<vmem>>, vector<1x1x1xf32>,
      %c0_28 = arith.constant 0 : index
      %c0_29 = arith.constant 0 : index
      %56 = vector.load %arg7[%c0_28, %c0_29] : memref<8x128xf32, #tpu.memory_space<vmem>>, vector<8x128xf32>
      %57 = vector.shape_cast %56 : vector<8x128xf32> to vector<1x8x128xf32>
      %cst_30 = arith.constant dense<0.000000e+00> : vector<1xf32>
      %58 = vector.multi_reduction <add>, %57, %cst_30 [1, 2] : vector<1x8x128xf32> to vector<1xf32>
      %59 = vector.shape_cast %58 : vector<1xf32> to vector<1x1x1xf32>
      %60 = vector.extract %59[0, 0, 0] : f32 from vector<1x1x1xf32>
      %61 = vector.broadcast %60 : f32 to vector<1x1xf32>
      %62 = vector.shape_cast %61 : vector<1x1xf32> to vector<1x1x1xf32>
      %c0_31 = arith.constant 0 : index
      %c0_32 = arith.constant 0 : index
      %c0_33 = arith.constant 0 : index
      %63 = vector.load %arg5[%c0_31, %c0_32, %c0_33] : memref<1x1x1xf32, #tpu.memory_space<vmem>>, vector<1x1x1xf32>
      tpu.vector_store %arg5[%c0_31, %c0_32, %c0_33], %62 {strides = array<i32>} : memref<1x1x1xf32, #tpu.memory_space<vmem>>, vector<1x1x1xf32>,
    } else {
    }
    return
  }
  func.func @transform_0(%arg0: i32, %arg1: i32) -> (i32, i32, i32) {
    %c1_i32 = arith.constant 1 : i32
    %0 = arith.muli %arg0, %c1_i32 : i32
    %1 = arith.addi %0, %arg1 : i32
    %c0_i32 = arith.constant 0 : i32
    %2 = arith.minsi %1, %c0_i32 : i32
    %c0_i32_0 = arith.constant 0 : i32
    %c0_i32_1 = arith.constant 0 : i32
    %c0_i32_2 = arith.constant 0 : i32
    return %2, %c0_i32_0, %c0_i32_1 : i32, i32, i32
  }
  func.func @transform_1(%arg0: i32, %arg1: i32) -> (i32, i32, i32) {
    %c1_i32 = arith.constant 1 : i32
    %0 = arith.muli %arg0, %c1_i32 : i32
    %1 = arith.addi %0, %arg1 : i32
    %c0_i32 = arith.constant 0 : i32
    %2 = arith.minsi %1, %c0_i32 : i32
    %c0_i32_0 = arith.constant 0 : i32
    %c0_i32_1 = arith.constant 0 : i32
    %c0_i32_2 = arith.constant 0 : i32
    return %2, %c0_i32_0, %c0_i32_1 : i32, i32, i32
  }
  func.func @transform_2(%arg0: i32, %arg1: i32) -> (i32, i32, i32) {
    %c0_i32 = arith.constant 0 : i32
    %c0_i32_0 = arith.constant 0 : i32
    %c0_i32_1 = arith.constant 0 : i32
    return %arg0, %c0_i32, %c0_i32_0 : i32, i32, i32
  }
  func.func @transform_3(%arg0: i32, %arg1: i32) -> (i32, i32, i32) {
    %c0_i32 = arith.constant 0 : i32
    %c0_i32_0 = arith.constant 0 : i32
    %c0_i32_1 = arith.constant 0 : i32
    return %arg0, %c0_i32, %c0_i32_0 : i32, i32, i32
  }
}

</mosaic_0001>

<llo_original>
// kernel: tpu_custom_call.1
$region0: #{tpu_custom_call.1}
  #allocation0 [shape = 'u32[]', space=smem, size = 0x4, offset = 0x4, fixed_abs, tag = 'smem constant byte address 0x4 - core index']
  #allocation1 [shape = 'u32[72,128]{1,0:T(1,128)}', space=vmem, size = 0x9000, scoped, tag = 'internal scratch']
  #allocation2 [shape = 'f32[8,128]{1,0:T(8,128)}', space=vmem, size = 0x1000, scoped, tag = 'scratch operand']
  #allocation3 [shape = 'f32[8,128]{1,0:T(8,128)}', space=vmem, size = 0x1000, scoped, tag = 'scratch operand']
  %s0 = inlined_call_operand.hbm [shape: f32[2,8,128], index: 0, kind: input, shape index: {}]
  %s1 = inlined_call_operand.hbm [shape: f32[2,8,128], index: 1, kind: input, shape index: {}]
  %s2 = inlined_call_operand.hbm [shape: f32[1,1,1], index: 2, kind: output, shape index: {0}]
  %s3 = inlined_call_operand.hbm [shape: f32[1,1,1], index: 3, kind: output, shape index: {1}]
  %4 = xla_tuple %s2, %s3
  %s5 = sld [smem:[#allocation0]]
  $region50: #{tpu_custom_call.1} parent=0
    _
  %s7 = ssub.s32 1, %s5
  %s8 = scalar_select 0, %s7, %s5
  $region1: #{tpu_custom_call.1} parent=0
    #allocation4 [shape = 'u8[8192]{0}', space=vmem, size = 0x2000, scoped, tag = 'input window, operand 0, single buffered']
    #allocation5 [shape = 's32[1]{0}', space=sflag, size = 0x4, scoped, tag = 'scoped memory for tpu_custom_call.1']
    #allocation6 [shape = 's32[1]{0}', space=sflag, size = 0x4, scoped, tag = 'scoped memory for tpu_custom_call.1']
    #allocation7 [shape = 'u8[8192]{0}', space=vmem, size = 0x2000, scoped, tag = 'input window, operand 1, single buffered']
    #allocation8 [shape = 's32[1]{0}', space=sflag, size = 0x4, scoped, tag = 'scoped memory for tpu_custom_call.1']
    #allocation9 [shape = 'u8[512]{0}', space=vmem, size = 0x400, scoped, tag = 'output window, operand 0, single buffered']
    #allocation10 [shape = 'u8[512]{0}', space=vmem, size = 0x400, scoped, tag = 'output window, operand 1, single buffered']
    #allocation11 [shape = 's32[1]{0}', space=sflag, size = 0x4, scoped, tag = 'scoped memory for tpu_custom_call.1']
    %9 = vsyncpa [#allocation5], 0
    %10 = vsyncpa [#allocation8], 0
    %11 = vsyncpa [#allocation6], 0
    %12 = vsyncpa [#allocation11], 0
    // Predicated region
    $region2: #{tpu_custom_call.1} parent=1 // pred_check
      _
    $region3: #{tpu_custom_call.1} parent=1 // pred_check_branch
      %14 = sbr.rel (0) target = $region5
    $region4: #{tpu_custom_call.1} parent=1 // pred_region
      %s15 = sadd.s32 0, 0
      %p16 = scmp.lt.s32.totalorder %s15, 0
      %s17 = scalar_select %p16, %s15, 0
      %s18 = smul.u32 2, %s17
      %20 = vsyncadd [#allocation5], 0
      %s21 = smul.addr %s18, 8
      %s22 = scalar_lea.hbm %s0, %s21
      %s23 = sshll.u32 %s22, 4
      %s24 = int_to_ptr.hbm [resolvable:$true] %s23
      %s25 = sshll.u32 [#allocation4], 4
      %s26 = int_to_ptr.vmem [resolvable:$true] %s25
      %31 = dma.hbm_to_vmem [thread:$0]  %s24, 256, %s26, [#allocation5], 128, 128, 8
    $region5: #{tpu_custom_call.1} parent=1 // pred_fallthru
      _
    // Predicated region
    $region6: #{tpu_custom_call.1} parent=1 // pred_check
      _
    $region7: #{tpu_custom_call.1} parent=1 // pred_check_branch
      %33 = sbr.rel (0) target = $region9
    $region8: #{tpu_custom_call.1} parent=1 // pred_region
      %s34 = sadd.s32 0, 0
      %p35 = scmp.lt.s32.totalorder %s34, 0
      %s36 = scalar_select %p35, %s34, 0
      %s37 = smul.u32 2, %s36
      %39 = vsyncadd [#allocation8], 0
      %s40 = smul.addr %s37, 8
      %s41 = scalar_lea.hbm %s1, %s40
      %s42 = sshll.u32 %s41, 4
      %s43 = int_to_ptr.hbm [resolvable:$true] %s42
      %s44 = sshll.u32 [#allocation7], 4
      %s45 = int_to_ptr.vmem [resolvable:$true] %s44
      %50 = dma.hbm_to_vmem [thread:$0]  %s43, 256, %s45, [#allocation8], 128, 128, 8
    $region9: #{tpu_custom_call.1} parent=1 // pred_fallthru
      _
    // Predicated region
    $region10: #{tpu_custom_call.1} parent=1 // pred_check
      _
    $region11: #{tpu_custom_call.1} parent=1 // pred_check_branch
      %52 = sbr.rel (0) target = $region13
    $region12: #{tpu_custom_call.1} parent=1 // pred_region
      %54 = dma.done [#allocation5], 256
    $region13: #{tpu_custom_call.1} parent=1 // pred_fallthru
      _
    // Predicated region
    $region14: #{tpu_custom_call.1} parent=1 // pred_check
      _
    $region15: #{tpu_custom_call.1} parent=1 // pred_check_branch
      %56 = sbr.rel (0) target = $region17
    $region16: #{tpu_custom_call.1} parent=1 // pred_region
      %58 = dma.done [#allocation8], 256
    $region17: #{tpu_custom_call.1} parent=1 // pred_fallthru
      _
    %s59 = sadd.s32 0, 0
    %p60 = scmp.lt.s32.totalorder %s59, 0
    %s61 = scalar_select %p60, %s59, 0
    %s62 = smul.u32 2, %s61
    %s63 = sadd.s32 0, 0
    %p64 = scmp.lt.s32.totalorder %s63, 0
    %s65 = scalar_select %p64, %s63, 0
    %s66 = smul.u32 2, %s65
    %p67 = scmp.eq.s32.totalorder 0, 0
    // Predicated region
    $region18: #{tpu_custom_call.1} parent=1 // pred_check
      %p68 = pneg %p67
    $region19: #{tpu_custom_call.1} parent=1 // pred_check_branch
      %70 = sbr.rel (%p68) target = $region21
    $region20: #{tpu_custom_call.1} parent=1 // pred_region
      %71 = vst [vmem:[#allocation2] sm:$0xff] 0.0
      %72 = vst [vmem:[#allocation3] sm:$0xff] 0.0
    $region21: #{tpu_custom_call.1} parent=1 // pred_fallthru
      _
    %v73 = vld [vmem:[#allocation4] sm:$0xff]
    %v74 = vld [vmem:[#allocation4 + $0x8] sm:$0xff]
    %v75 = vld [vmem:[#allocation7] sm:$0xff]
    %v76 = vld [vmem:[#allocation7 + $0x8] sm:$0xff]
    %v77 = vand.u32 2147483647, %v73
    %v78 = vand.u32 2147483647, %v74
    %v79 = vsub.f32 0.0, %v77
    %v80 = vsub.f32 0.0, %v78
    %v81 = vmul.f32 %v79, 1.442695
    %v82 = vpow.pop %v81
    %v83 = vmul.f32 %v80, 1.442695
    %v84 = vpow.pop %v83
    %v85 = vadd.f32 %v82, 1.0
    %v86 = vlog2.pop %v85
    %v87 = vmul.f32 %v86, 0.6931472
    %v88 = vmul.f32 -0.5, %v82
    %v89 = vadd.f32 %v88, 1.0
    %v90 = vmul.f32 %v89, %v82
    %v91 = vand.u32 2147483647, %v82
    %vm92 = vcmp.lt.f32.partialorder %v91, 0.0004427343
    %v93 = vsel %vm92, %v90, %v87
    %v94 = vadd.f32 %v84, 1.0
    %v95 = vlog2.pop %v94
    %v96 = vmul.f32 %v95, 0.6931472
    %v97 = vmul.f32 -0.5, %v84
    %v98 = vadd.f32 %v97, 1.0
    %v99 = vmul.f32 %v98, %v84
    %v100 = vand.u32 2147483647, %v84
    %vm101 = vcmp.lt.f32.partialorder %v100, 0.0004427343
    %v102 = vsel %vm101, %v99, %v96
    %v103 = vmul.f32 %v73, %v75
    %v104 = vmul.f32 %v74, %v76
    %v105 = vsub.f32 %v73, %v103
    %v106 = vsub.f32 %v74, %v104
    %v107 = vsub.f32 0.0, %v73
    %v108 = vsub.f32 0.0, %v74
    %v109 = vmax.f32 %v107, 0.0
    %v110 = vmax.f32 %v108, 0.0
    %v111 = vadd.f32 %v105, %v109
    %v112 = vadd.f32 %v106, %v110
    %v113 = vadd.f32 %v111, %v93
    %v114 = vadd.f32 %v112, %v102
    %v115 = vmul.f32 %v75, 2.0
    %v116 = vmul.f32 %v76, 2.0
    %v117 = vsub.f32 %v115, 1.0
    %v118 = vsub.f32 %v116, 1.0
    %v119 = vmul.f32 %v107, %v117
    %v120 = vmul.f32 %v108, %v118
    %v121 = vmin.f32 %v119, 0.0
    %v122 = vmin.f32 %v120, 0.0
    %v123 = vsub.f32 %v121, %v93
    %v124 = vsub.f32 %v122, %v102
    %v125 = vmul.f32 %v123, 2.0
    %v126 = vmul.f32 %v124, 2.0
    %v127 = vmul.f32 %v125, 1.442695
    %v128 = vpow.pop %v127
    %v129 = vmul.f32 %v126, 1.442695
    %v130 = vpow.pop %v129
    %v131 = vmul.f32 %v128, %v113
    %v132 = vmul.f32 %v130, %v114
    %vm133 = vcmp.gt.f32.partialorder %v75, 0.5
    %vm134 = vcmp.gt.f32.partialorder %v76, 0.5
    %v135 = vsel %vm133, 1.0, 0.0
    %v136 = vsel %vm134, 1.0, 0.0
    %s137 = sadd.s32 0, 0
    %p138 = scmp.lt.s32.totalorder %s137, 0
    // Predicated region
    $region22: #{tpu_custom_call.1} parent=1 // pred_check
      %p139 = pneg %p138
    $region23: #{tpu_custom_call.1} parent=1 // pred_check_branch
      %141 = sbr.rel (%p139) target = $region25
    $region24: #{tpu_custom_call.1} parent=1 // pred_region
      %v142 = vld [vmem:[#allocation2] sm:$0xff]
      %v143 = vadd.f32 %v131, %v132
      %v144 = vadd.f32 %v142, %v143
      %145 = vst [vmem:[#allocation2] sm:$0xff] %v144
      %v146 = vld [vmem:[#allocation3] sm:$0xff]
      %v147 = vadd.f32 %v135, %v136
      %v148 = vadd.f32 %v146, %v147
      %149 = vst [vmem:[#allocation3] sm:$0xff] %v148
    $region25: #{tpu_custom_call.1} parent=1 // pred_fallthru
      _
    %p150 = scmp.eq.s32.totalorder %s137, 0
    // Predicated region
    $region26: #{tpu_custom_call.1} parent=1 // pred_check
      %p151 = pneg %p150
    $region27: #{tpu_custom_call.1} parent=1 // pred_check_branch
      %153 = sbr.rel (%p151) target = $region29
    $region28: #{tpu_custom_call.1} parent=1 // pred_region
      %v154 = vlaneseq
      %v155 = vshrl.u32 %v154, 7
      %v156 = vmul.u32 %v155, 128
      %v157 = vadd.s32 %v156, 1024
      %v158 = vlaneseq
      %v159 = vand.u32 %v158, 127
      %v160 = vadd.s32 %v156, %v159
      %v161 = vadd.s32 %v157, %v159
      %vm162 = vcmp.lt.s32.totalorder %v160, 2048
      %vm163 = vcmp.lt.s32.totalorder %v161, 2048
      %v164 = vld [vmem:[#allocation2] sm:$0xff]
      %v165 = vsel %vm162, %v131, 0.0
      %v166 = vsel %vm163, %v132, 0.0
      %v167 = vadd.f32 %v165, %v166
      %v168 = vadd.f32 %v164, %v167
      %169 = vst [vmem:[#allocation2] sm:$0xff] %v168
      %v170 = vld [vmem:[#allocation3] sm:$0xff]
      %v171 = vsel %vm162, %v135, 0.0
      %v172 = vsel %vm163, %v136, 0.0
      %v173 = vadd.f32 %v171, %v172
      %v174 = vadd.f32 %v170, %v173
      %175 = vst [vmem:[#allocation3] sm:$0xff] %v174
    $region29: #{tpu_custom_call.1} parent=1 // pred_fallthru
      _
    // Predicated region
    $region30: #{tpu_custom_call.1} parent=1 // pred_check
      %p176 = pneg %p67
    $region31: #{tpu_custom_call.1} parent=1 // pred_check_branch
      %178 = sbr.rel (%p176) target = $region33
    $region32: #{tpu_custom_call.1} parent=1 // pred_region
      %v179 = vld [vmem:[#allocation2] sm:$0xff]
      %180 = vadd.xlane.f32.xlu0 %v179
      %v181 = vpop.xlane.xlu0 %180
      %v182 = vrot.slane %v181, 4
      %v183 = vadd.f32 %v181, %v182
      %v184 = vrot.slane %v183, 2
      %v185 = vadd.f32 %v183, %v184
      %v186 = vrot.slane %v185, 1
      %v187 = vadd.f32 %v185, %v186
      %s188 = vtos %v187
      %v189 = vstv %s188
      %vm190 = vcmask 0
      %191 = vst.msk [vmem:[#allocation9] sm:$0x1] %vm190, %v189
      %v192 = vld [vmem:[#allocation3] sm:$0xff]
      %193 = vadd.xlane.f32.xlu0 %v192
      %v194 = vpop.xlane.xlu0 %193
      %v195 = vrot.slane %v194, 4
      %v196 = vadd.f32 %v194, %v195
      %v197 = vrot.slane %v196, 2
      %v198 = vadd.f32 %v196, %v197
      %v199 = vrot.slane %v198, 1
      %v200 = vadd.f32 %v198, %v199
      %s201 = vtos %v200
      %v202 = vstv %s201
      %203 = vst.msk [vmem:[#allocation10] sm:$0x1] %vm190, %v202
    $region33: #{tpu_custom_call.1} parent=1 // pred_fallthru
      _
    // Predicated region
    $region34: #{tpu_custom_call.1} parent=1 // pred_check
      _
    $region35: #{tpu_custom_call.1} parent=1 // pred_check_branch
      %205 = sbr.rel (0) target = $region37
    $region36: #{tpu_custom_call.1} parent=1 // pred_region
      %207 = vsyncadd [#allocation6], 0
      %s209 = sshll.u32 [#allocation9], 4
      %s210 = int_to_ptr.vmem [resolvable:$true] %s209
      %s211 = sshll.u32 %s2, 4
      %s212 = int_to_ptr.hbm [resolvable:$true] %s211
      %214 = dma.vmem_to_hbm [thread:$0]  %s210, 16, %s212, [#allocation6]
    $region37: #{tpu_custom_call.1} parent=1 // pred_fallthru
      _
    // Predicated region
    $region38: #{tpu_custom_call.1} parent=1 // pred_check
      _
    $region39: #{tpu_custom_call.1} parent=1 // pred_check_branch
      %216 = sbr.rel (0) target = $region41
    $region40: #{tpu_custom_call.1} parent=1 // pred_region
      %218 = vsyncadd [#allocation11], 0
      %s220 = sshll.u32 [#allocation10], 4
      %s221 = int_to_ptr.vmem [resolvable:$true] %s220
      %s222 = sshll.u32 %s3, 4
      %s223 = int_to_ptr.hbm [resolvable:$true] %s222
      %225 = dma.vmem_to_hbm [thread:$0]  %s221, 16, %s223, [#allocation11]
    $region41: #{tpu_custom_call.1} parent=1 // pred_fallthru
      _
    // Predicated region
    $region42: #{tpu_custom_call.1} parent=1 // pred_check
      _
    $region43: #{tpu_custom_call.1} parent=1 // pred_check_branch
      %227 = sbr.rel (0) target = $region45
    $region44: #{tpu_custom_call.1} parent=1 // pred_region
      %229 = dma.done [#allocation6], 16
    $region45: #{tpu_custom_call.1} parent=1 // pred_fallthru
      _
    // Predicated region
    $region46: #{tpu_custom_call.1} parent=1 // pred_check
      _
    $region47: #{tpu_custom_call.1} parent=1 // pred_check_branch
      %231 = sbr.rel (0) target = $region49
    $region48: #{tpu_custom_call.1} parent=1 // pred_region
      %233 = dma.done [#allocation11], 16
    $region49: #{tpu_custom_call.1} parent=1 // pred_fallthru
      _
    %234 = vsyncpa [#allocation5], 1
    %235 = vsyncpa [#allocation8], 1
    %236 = vsyncpa [#allocation6], 1
    %237 = vsyncpa [#allocation11], 1

</llo_original>
